<compile_context>
chip_gen: v7x
topology: tpu7x:2x2x1
jax: 0.10.0
libtpu: 0.0.40
codegen_flags: <defaults>
</compile_context>

<pallas_src>
import functools

import jax
import jax.numpy as jnp
import numpy as np
from jax.experimental import pallas as pl
from jax.experimental.pallas import tpu as pltpu


def _loss_kernel(pt_ref, en_ref, out_ref, *, eppsilon, inv_batch, inv_n_mse):
    """One loss instance per grid step.

    pt_ref : (2, B, B)  packed [pred_dist, target_dist]
    en_ref : (2, B, D)  packed [sampled normal target t, embedding]
    out_ref: (8, 128)   f32; [0,0]=total, [0,1]=kl, [0,2]=mse, rest padding
    """
    pred = pt_ref[0].astype(jnp.float32)
    targ = pt_ref[1].astype(jnp.float32)
    t = en_ref[0].astype(jnp.float32)
    emb = en_ref[1].astype(jnp.float32)

    # nn.KLDivLoss(log_target=False): pointwise = xlogy(t, t) - t * input
    # (no t==0 guard: continuous Normal sample; negative t -> NaN like PyTorch)
    # reduction='batchmean': sum over all elements / batch size, then torch.abs
    kl = jnp.abs(jnp.sum(t * jnp.log(t) - t * emb) * inv_batch)

    # nn.MSELoss(): mean over all elements of squared difference
    diff = pred - targ
    mse = jnp.sum(diff * diff) * inv_n_mse

    total = mse + eppsilon * kl

    # Lane-dense packed scalar writeback (single unmasked (8,128) store).
    lane = jax.lax.broadcasted_iota(jnp.int32, (8, 128), 1)
    out_ref[...] = jnp.where(
        lane == 0, total,
        jnp.where(lane == 1, kl,
                  jnp.where(lane == 2, mse, 0.0)))


def distance_kl_mse_loss(pred_dist, target_dist, embedding, key,
                         eppsilon=2.0, mu=0.0, sd=1.0):
    """Pallas implementation of DistanceKLMSELoss.forward.

    pred_dist / target_dist: (B, B) or (N, B, B)
    embedding:               (B, D) or (N, B, D)
    key: jax PRNG key for the Normal(mu, sd) target sample. Pass a FRESH key
         every training step (do not reuse, or the "random" target repeats).

    Returns (total_loss, kl_loss, mse_loss); scalars if inputs are unbatched,
    else shape (N,).
    """
    unbatched = embedding.ndim == 2
    if unbatched:
        pred_dist = pred_dist[None]
        target_dist = target_dist[None]
        embedding = embedding[None]

    N, B, D = embedding.shape
    _, Bp, Bq = pred_dist.shape

    # Host-side Normal(mu, sd) sample (replaces torch.distributions.Normal.sample;
    # in-kernel pltpu PRNG is TPU-lowering-only and not available in interpret mode).
    noise = mu + sd * jax.random.normal(key, embedding.shape, dtype=jnp.float32)

    # Pack inputs: 2 DMAs per grid step instead of 4 tiny ones.
    pt = jnp.stack([pred_dist.astype(jnp.float32),
                    target_dist.astype(jnp.float32)], axis=1)   # (N, 2, B, B)
    en = jnp.stack([noise, embedding.astype(jnp.float32)], axis=1)  # (N, 2, B, D)

    kernel = functools.partial(
        _loss_kernel,
        eppsilon=float(eppsilon),
        inv_batch=1.0 / float(B),          # KLDivLoss 'batchmean' divisor
        inv_n_mse=1.0 / float(Bp * Bq),    # MSELoss 'mean' divisor
    )

    cost = pl.CostEstimate(
        flops=N * (5 * B * D + 3 * Bp * Bq),
        transcendentals=N * B * D,                       # one log per element
        bytes_accessed=4 * N * (2 * B * D + 2 * Bp * Bq + 8 * 128),
    )

    out = pl.pallas_call(
        kernel,
        grid=(N,),
        in_specs=[
            pl.BlockSpec((None, 2, Bp, Bq), lambda i: (i, 0, 0, 0)),
            pl.BlockSpec((None, 2, B, D), lambda i: (i, 0, 0, 0)),
        ],
        out_specs=pl.BlockSpec((None, 8, 128), lambda i: (i, 0, 0)),
        out_shape=jax.ShapeDtypeStruct((N, 8, 128), jnp.float32),
        compiler_params=pltpu.CompilerParams(
            dimension_semantics=("parallel",)),
        cost_estimate=cost,
    )(pt, en)

    total, kl, mse = out[:, 0, 0], out[:, 0, 1], out[:, 0, 2]
    if unbatched:
        total, kl, mse = total[0], kl[0], mse[0]
    return total, kl, mse


def _reference(pred_dist, target_dist, embedding, noise, eppsilon):
    """Pure-JAX reference (assumes noise > 0 so xlogy(t,t) = t*log(t))."""
    B = embedding.shape[-2]
    kl = jnp.abs(jnp.sum(noise * jnp.log(noise) - noise * embedding,
                         axis=(-2, -1)) / B)
    mse = jnp.mean((pred_dist - target_dist) ** 2, axis=(-2, -1))
    total = mse + eppsilon * kl
    return total, kl, mse


if __name__ == "__main__":
    key = jax.random.PRNGKey(0)
    k_emb, k_pred, k_targ, k_noise = jax.random.split(key, 4)

    # Small shapes consistent with the module; N=4 loss instances batched
    # under one pallas_call (the key structural optimization).
    N, B, D = 4, 8, 128
    embedding = jax.random.normal(k_emb, (N, B, D), dtype=jnp.float32)
    pred_dist = jax.random.normal(k_pred, (N, B, B), dtype=jnp.float32)
    target_dist = jax.random.normal(k_targ, (N, B, B), dtype=jnp.float32)

    # mu=3.0, sd=0.5 keeps the sampled target positive so kl is finite
    # (the module defaults mu=0, sd=1 give NaN kl, matching PyTorch).
    eppsilon, mu, sd = 2.0, 3.0, 0.5

    total, kl, mse = distance_kl_mse_loss(
        pred_dist, target_dist, embedding, k_noise,
        eppsilon=eppsilon, mu=mu, sd=sd)
    jax.block_until_ready((total, kl, mse))

    # Reference check: same host-sampled noise as the wrapper (same key).
    noise = mu + sd * jax.random.normal(k_noise, embedding.shape, dtype=jnp.float32)
    total_ref, kl_ref, mse_ref = _reference(pred_dist, target_dist, embedding,
                                            noise, eppsilon)
    np.testing.assert_allclose(np.asarray(total), np.asarray(total_ref),
                               rtol=5e-3, atol=1e-4)
    np.testing.assert_allclose(np.asarray(kl), np.asarray(kl_ref),
                               rtol=5e-3, atol=1e-4)
    np.testing.assert_allclose(np.asarray(mse), np.asarray(mse_ref),
                               rtol=5e-3, atol=1e-4)

    print("KERNEL_OK")
</pallas_src>

<mosaic_0001>
module attributes {stable_mosaic.version = 11 : i64} {
  func.func @_loss_kernel(%arg0: i32, %arg1: memref<1x2x8x8xf32, #tpu.memory_space<vmem>>, %arg2: memref<1x2x8x128xf32, #tpu.memory_space<vmem>>, %arg3: memref<1x8x128xf32, #tpu.memory_space<vmem>>) attributes {dimension_semantics = [#tpu.dimension_semantics<parallel>], iteration_bounds = array<i64: 4>, scalar_prefetch = 0 : i64, scratch_operands = 0 : i64, tpu.core_type = #tpu.core_type<tc>, window_params = [{transform_indices = @transform_0, window_bounds = array<i64: 1, 2, 8, 8>}, {transform_indices = @transform_1, window_bounds = array<i64: 1, 2, 8, 128>}, {transform_indices = @transform_2, window_bounds = array<i64: 1, 8, 128>}]} {
    %c0 = arith.constant 0 : index
    %c0_0 = arith.constant 0 : index
    %c0_1 = arith.constant 0 : index
    %c0_2 = arith.constant 0 : index
    %0 = vector.load %arg1[%c0, %c0_0, %c0_1, %c0_2] : memref<1x2x8x8xf32, #tpu.memory_space<vmem>>, vector<1x1x8x8xf32>
    %1 = vector.shape_cast %0 : vector<1x1x8x8xf32> to vector<8x8xf32>
    %c0_3 = arith.constant 0 : index
    %c1 = arith.constant 1 : index
    %c0_4 = arith.constant 0 : index
    %c0_5 = arith.constant 0 : index
    %2 = vector.load %arg1[%c0_3, %c1, %c0_4, %c0_5] : memref<1x2x8x8xf32, #tpu.memory_space<vmem>>, vector<1x1x8x8xf32>
    %3 = vector.shape_cast %2 : vector<1x1x8x8xf32> to vector<8x8xf32>
    %c0_6 = arith.constant 0 : index
    %c0_7 = arith.constant 0 : index
    %c0_8 = arith.constant 0 : index
    %c0_9 = arith.constant 0 : index
    %4 = vector.load %arg2[%c0_6, %c0_7, %c0_8, %c0_9] : memref<1x2x8x128xf32, #tpu.memory_space<vmem>>, vector<1x1x8x128xf32>
    %5 = vector.shape_cast %4 : vector<1x1x8x128xf32> to vector<8x128xf32>
    %c0_10 = arith.constant 0 : index
    %c1_11 = arith.constant 1 : index
    %c0_12 = arith.constant 0 : index
    %c0_13 = arith.constant 0 : index
    %6 = vector.load %arg2[%c0_10, %c1_11, %c0_12, %c0_13] : memref<1x2x8x128xf32, #tpu.memory_space<vmem>>, vector<1x1x8x128xf32>
    %7 = vector.shape_cast %6 : vector<1x1x8x128xf32> to vector<8x128xf32>
    %8 = math.log %5 : vector<8x128xf32>
    %9 = arith.mulf %5, %8 : vector<8x128xf32>
    %10 = arith.mulf %5, %7 : vector<8x128xf32>
    %11 = arith.subf %9, %10 : vector<8x128xf32>
    %12 = vector.shape_cast %11 : vector<8x128xf32> to vector<1x8x128xf32>
    %cst = arith.constant dense<0.000000e+00> : vector<1xf32>
    %13 = vector.multi_reduction <add>, %12, %cst [1, 2] : vector<1x8x128xf32> to vector<1xf32>
    %14 = vector.shape_cast %13 : vector<1xf32> to vector<1x1x1xf32>
    %15 = vector.extract %14[0, 0, 0] : f32 from vector<1x1x1xf32>
    %cst_14 = arith.constant 1.250000e-01 : f32
    %16 = arith.mulf %15, %cst_14 : f32
    %17 = math.absf %16 : f32
    %18 = arith.subf %1, %3 : vector<8x8xf32>
    %19 = arith.mulf %18, %18 : vector<8x8xf32>
    %20 = vector.shape_cast %19 : vector<8x8xf32> to vector<1x8x8xf32>
    %cst_15 = arith.constant dense<0.000000e+00> : vector<1xf32>
    %21 = vector.multi_reduction <add>, %20, %cst_15 [1, 2] : vector<1x8x8xf32> to vector<1xf32>
    %22 = vector.shape_cast %21 : vector<1xf32> to vector<1x1x1xf32>
    %23 = vector.extract %22[0, 0, 0] : f32 from vector<1x1x1xf32>
    %cst_16 = arith.constant 1.562500e-02 : f32
    %24 = arith.mulf %23, %cst_16 : f32
    %cst_17 = arith.constant 2.000000e+00 : f32
    %25 = arith.mulf %cst_17, %17 : f32
    %26 = arith.addf %24, %25 : f32
    %27 = tpu.iota {dimensions = array<i32: 1>} : vector<8x128xi32>
    %c0_i32 = arith.constant 0 : i32
    %28 = vector.broadcast %c0_i32 : i32 to vector<8x128xi32>
    %29 = arith.cmpi eq, %27, %28 : vector<8x128xi32>
    %c1_i32 = arith.constant 1 : i32
    %30 = vector.broadcast %c1_i32 : i32 to vector<8x128xi32>
    %31 = arith.cmpi eq, %27, %30 : vector<8x128xi32>
    %c2_i32 = arith.constant 2 : i32
    %32 = vector.broadcast %c2_i32 : i32 to vector<8x128xi32>
    %33 = arith.cmpi eq, %27, %32 : vector<8x128xi32>
    %cst_18 = arith.constant 0.000000e+00 : f32
    %34 = vector.broadcast %24 : f32 to vector<8x128xf32>
    %35 = vector.broadcast %cst_18 : f32 to vector<8x128xf32>
    %36 = arith.select %33, %34, %35 : vector<8x128xi1>, vector<8x128xf32>
    %37 = vector.broadcast %17 : f32 to vector<8x128xf32>
    %38 = arith.select %31, %37, %36 : vector<8x128xi1>, vector<8x128xf32>
    %39 = vector.broadcast %26 : f32 to vector<8x128xf32>
    %40 = arith.select %29, %39, %38 : vector<8x128xi1>, vector<8x128xf32>
    %c0_19 = arith.constant 0 : index
    %c0_20 = arith.constant 0 : index
    %c0_21 = arith.constant 0 : index
    %41 = vector.load %arg3[%c0_19, %c0_20, %c0_21] : memref<1x8x128xf32, #tpu.memory_space<vmem>>, vector<1x8x128xf32>
    %42 = vector.shape_cast %41 : vector<1x8x128xf32> to vector<8x128xf32>
    %43 = vector.shape_cast %40 : vector<8x128xf32> to vector<1x8x128xf32>
    tpu.vector_store %arg3[%c0_19, %c0_20, %c0_21], %43 {strides = array<i32>} : memref<1x8x128xf32, #tpu.memory_space<vmem>>, vector<1x8x128xf32>,
    return
  }
  func.func @transform_0(%arg0: i32) -> (i32, i32, i32, i32) {
    %c0_i32 = arith.constant 0 : i32
    %c0_i32_0 = arith.constant 0 : i32
    %c0_i32_1 = arith.constant 0 : i32
    %c0_i32_2 = arith.constant 0 : i32
    return %arg0, %c0_i32, %c0_i32_0, %c0_i32_1 : i32, i32, i32, i32
  }
  func.func @transform_1(%arg0: i32) -> (i32, i32, i32, i32) {
    %c0_i32 = arith.constant 0 : i32
    %c0_i32_0 = arith.constant 0 : i32
    %c0_i32_1 = arith.constant 0 : i32
    %c0_i32_2 = arith.constant 0 : i32
    return %arg0, %c0_i32, %c0_i32_0, %c0_i32_1 : i32, i32, i32, i32
  }
  func.func @transform_2(%arg0: i32) -> (i32, i32, i32) {
    %c0_i32 = arith.constant 0 : i32
    %c0_i32_0 = arith.constant 0 : i32
    %c0_i32_1 = arith.constant 0 : i32
    return %arg0, %c0_i32, %c0_i32_0 : i32, i32, i32
  }
}

</mosaic_0001>

<llo_original>
// kernel: tpu_custom_call.1
$region0: #{tpu_custom_call.1}
  #allocation0 [shape = 'u32[]', space=smem, size = 0x4, offset = 0x4, fixed_abs, tag = 'smem constant byte address 0x4 - core index']
  #allocation1 [shape = 'u32[144,128]{1,0:T(1,128)}', space=vmem, size = 0x12000, scoped, tag = 'internal scratch']
  %s0 = inlined_call_operand.hbm [shape: f32[4,2,8,8], index: 0, kind: input, shape index: {}]
  %s1 = inlined_call_operand.hbm [shape: f32[4,2,8,128], index: 1, kind: input, shape index: {}]
  %s2 = inlined_call_operand.hbm [shape: f32[4,8,128], index: 2, kind: output, shape index: {}]
  %s3 = sld [smem:[#allocation0]]
  $region49: #{tpu_custom_call.1} parent=0
    _
  %s5 = ssub.s32 1, %s3
  %s6 = scalar_select 0, %s5, %s3
  $region1: #{tpu_custom_call.1} parent=0
    #allocation2 [shape = 'u8[16384]{0}', space=vmem, size = 0x4000, scoped, tag = 'input window, operand 0']
    #allocation3 [shape = 's32[2]{0}', space=sflag, size = 0x8, scoped, tag = 'scoped memory for tpu_custom_call.1']
    #allocation4 [shape = 's32[2]{0}', space=sflag, size = 0x8, scoped, tag = 'scoped memory for tpu_custom_call.1']
    #allocation5 [shape = 'u8[16384]{0}', space=vmem, size = 0x4000, scoped, tag = 'input window, operand 1']
    #allocation6 [shape = 's32[2]{0}', space=sflag, size = 0x8, scoped, tag = 'scoped memory for tpu_custom_call.1']
    #allocation7 [shape = 'u8[8192]{0}', space=vmem, size = 0x2000, scoped, tag = 'output window, operand 0']
    %7 = vsyncpa [#allocation3], 0
    %s8 = scalar_lea.sflag [#allocation3], 1
    %9 = vsyncpa %s8, 0
    %10 = vsyncpa [#allocation6], 0
    %s11 = scalar_lea.sflag [#allocation6], 1
    %12 = vsyncpa %s11, 0
    %13 = vsyncpa [#allocation4], 0
    %s14 = scalar_lea.sflag [#allocation4], 1
    %15 = vsyncpa %s14, 0
    loop: start=0, step=1, limit=6
    $region2: #{tpu_custom_call.1} parent=1 // loop_pre_header
      _
    $region3: #{tpu_custom_call.1} parent=1 // loop_header
      %s17 = sphi 0, %s21
      %p18 = scmp.ge.s32.totalorder %s17, 6
      %s27 = sphi 0, %s29
      %s30 = sphi 0, %s27
      %s31 = sphi 0, %s30
      %s47 = sphi 0, %s31
      %s53 = sphi 0, %s55
      %s56 = sphi 0, %s53
      %s57 = sphi 0, %s56
      %s73 = sphi 0, %s57
      %s79 = sphi 0, %s81
      %s82 = sphi 0, %s79
      %s83 = sphi 0, %s82
      %s99 = sphi 0, %s83
    $region4: #{tpu_custom_call.1} parent=1 // loop_header_branch
      %20 = sbr.rel (%p18) target = $region8
    $region5: #{tpu_custom_call.1} parent=1 // loop_body
      %s22 = ssub.s32 %s17, 1
      %s23 = ssub.s32 %s17, 2
      %s24 = sadd.s32 %s17, 1
      %s25 = ssub.s32 %s17, %s24
      %p26 = scmp.eq.s32.totalorder %s25, 0
      %s28 = sadd.s32 %s27, 1
      %s29 = scalar_select %p26, %s27, %s28
      %p32 = pneg %p26
      %p33 = scmp.eq.s32.totalorder %s17, 3
      %p34 = por %p32, %p33
      %p35 = scmp.ne.s32.totalorder %s27, %s30
      %p36 = scmp.eq.s32.totalorder %s17, 0
      %p37 = por %p35, %p36
      %p38 = scmp.ne.s32.totalorder %s27, %s30
      %p39 = scmp.eq.s32.totalorder %s22, 3
      %p40 = por %p38, %p39
      %p41 = scmp.ne.s32.totalorder %s30, %s31
      %p42 = scmp.eq.s32.totalorder %s22, 0
      %p43 = por %p41, %p42
      %p44 = scmp.ne.s32.totalorder %s30, %s31
      %p45 = scmp.eq.s32.totalorder %s23, 3
      %p46 = por %p44, %p45
      %p48 = scmp.ne.s32.totalorder %s31, %s47
      %p49 = scmp.eq.s32.totalorder %s23, 0
      %p50 = por %p48, %p49
      %s51 = ssub.s32 %s17, %s24
      %p52 = scmp.eq.s32.totalorder %s51, 0
      %s54 = sadd.s32 %s53, 1
      %s55 = scalar_select %p52, %s53, %s54
      %p58 = pneg %p52
      %p59 = scmp.eq.s32.totalorder %s17, 3
      %p60 = por %p58, %p59
      %p61 = scmp.ne.s32.totalorder %s53, %s56
      %p62 = scmp.eq.s32.totalorder %s17, 0
      %p63 = por %p61, %p62
      %p64 = scmp.ne.s32.totalorder %s53, %s56
      %p65 = scmp.eq.s32.totalorder %s22, 3
      %p66 = por %p64, %p65
      %p67 = scmp.ne.s32.totalorder %s56, %s57
      %p68 = scmp.eq.s32.totalorder %s22, 0
      %p69 = por %p67, %p68
      %p70 = scmp.ne.s32.totalorder %s56, %s57
      %p71 = scmp.eq.s32.totalorder %s23, 3
      %p72 = por %p70, %p71
      %p74 = scmp.ne.s32.totalorder %s57, %s73
      %p75 = scmp.eq.s32.totalorder %s23, 0
      %p76 = por %p74, %p75
      %s77 = ssub.s32 %s17, %s24
      %p78 = scmp.eq.s32.totalorder %s77, 0
      %s80 = sadd.s32 %s79, 1
      %s81 = scalar_select %p78, %s79, %s80
      %p84 = pneg %p78
      %p85 = scmp.eq.s32.totalorder %s17, 3
      %p86 = por %p84, %p85
      %p87 = scmp.ne.s32.totalorder %s79, %s82
      %p88 = scmp.eq.s32.totalorder %s17, 0
      %p89 = por %p87, %p88
      %p90 = scmp.ne.s32.totalorder %s79, %s82
      %p91 = scmp.eq.s32.totalorder %s22, 3
      %p92 = por %p90, %p91
      %p93 = scmp.ne.s32.totalorder %s82, %s83
      %p94 = scmp.eq.s32.totalorder %s22, 0
      %p95 = por %p93, %p94
      %p96 = scmp.ne.s32.totalorder %s82, %s83
      %p97 = scmp.eq.s32.totalorder %s23, 3
      %p98 = por %p96, %p97
      %p100 = scmp.ne.s32.totalorder %s83, %s99
      %p101 = scmp.eq.s32.totalorder %s23, 0
      %p102 = por %p100, %p101
      %p103 = scmp.le.s32.totalorder 1, %s17
      %p104 = scmp.lt.s32.totalorder %s17, 5
      %p105 = pnand %p103, %p104
      %p106 = pneg %p105
      // Predicated region
      $region9: #{tpu_custom_call.1} parent=5 // pred_check
        _
      $region10: #{tpu_custom_call.1} parent=5 // pred_check_branch
        %108 = sbr.rel (%p105) target = $region12
      $region11: #{tpu_custom_call.1} parent=5 // pred_region
        %s109 = ssub.s32 %s17, 1
      $region12: #{tpu_custom_call.1} parent=5 // pred_fallthru
        _
      %p110 = scmp.lt.s32.totalorder %s17, 4
      // Predicated region
      $region13: #{tpu_custom_call.1} parent=5 // pred_check
        %p111 = pneg %p110
      $region14: #{tpu_custom_call.1} parent=5 // pred_check_branch
        %113 = sbr.rel (%p111) target = $region16
      $region15: #{tpu_custom_call.1} parent=5 // pred_region
        // Predicated region
        $region17: #{tpu_custom_call.1} parent=15 // pred_check
          %p114 = pneg %p37
        $region18: #{tpu_custom_call.1} parent=15 // pred_check_branch
          %116 = sbr.rel (%p114) target = $region20
        $region19: #{tpu_custom_call.1} parent=15 // pred_region
          %s117 = sand.u32 %s27, 1
          %s118 = scalar_lea.sflag [#allocation3], %s117
          %s119 = sand.u32 %s27, 1
          %s120 = smul.addr %s119, 16
          %s121 = scalar_lea.vmem [#allocation2], %s120
          %s123 = ssub.s32 256, 256
          %124 = vsyncadd %s118, %s123
          %s125 = smul.addr %s17, 2
          %s126 = smul.addr %s125, 128
          %s127 = scalar_lea.hbm %s0, %s126
          %s128 = sshll.u32 %s121, 4
          %s129 = int_to_ptr.vmem [resolvable:$true] %s128
          %134 = dma.hbm_to_vmem [thread:$0]  %s127, 256, %s129, %s118, 128, 128, 8
        $region20: #{tpu_custom_call.1} parent=15 // pred_fallthru
          _
        // Predicated region
        $region21: #{tpu_custom_call.1} parent=15 // pred_check
          %p135 = pneg %p63
        $region22: #{tpu_custom_call.1} parent=15 // pred_check_branch
          %137 = sbr.rel (%p135) target = $region24
        $region23: #{tpu_custom_call.1} parent=15 // pred_region
          %s138 = sand.u32 %s53, 1
          %s139 = scalar_lea.sflag [#allocation6], %s138
          %s140 = sand.u32 %s53, 1
          %s141 = smul.addr %s140, 16
          %s142 = scalar_lea.vmem [#allocation5], %s141
          %s144 = ssub.s32 256, 256
          %145 = vsyncadd %s139, %s144
          %s146 = smul.addr %s17, 2
          %s147 = smul.addr %s146, 128
          %s148 = scalar_lea.hbm %s1, %s147
          %s149 = sshll.u32 %s142, 4
          %s150 = int_to_ptr.vmem [resolvable:$true] %s149
          %155 = dma.hbm_to_vmem [thread:$0]  %s148, 256, %s150, %s139, 128, 128, 8
        $region24: #{tpu_custom_call.1} parent=15 // pred_fallthru
          _
      $region16: #{tpu_custom_call.1} parent=5 // pred_fallthru
        _
      %p156 = scmp.le.s32.totalorder 1, %s17
      %p157 = scmp.lt.s32.totalorder %s17, 5
      %p158 = pnand %p156, %p157
      %p159 = pneg %p158
      // Predicated region
      $region25: #{tpu_custom_call.1} parent=5 // pred_check
        _
      $region26: #{tpu_custom_call.1} parent=5 // pred_check_branch
        %161 = sbr.rel (%p158) target = $region28
      $region27: #{tpu_custom_call.1} parent=5 // pred_region
        %s162 = ssub.s32 %s17, 1
        %s163 = sand.u32 %s30, 1
        %s164 = scalar_lea.sflag [#allocation3], %s163
        %s165 = sand.u32 %s30, 1
        %s166 = smul.addr %s165, 16
        %s167 = scalar_lea.vmem [#allocation2], %s166
        // Predicated region
        $region29: #{tpu_custom_call.1} parent=27 // pred_check
          %p168 = pneg %p43
        $region30: #{tpu_custom_call.1} parent=27 // pred_check_branch
          %170 = sbr.rel (%p168) target = $region32
        $region31: #{tpu_custom_call.1} parent=27 // pred_region
          %171 = dma.done %s164, 256
        $region32: #{tpu_custom_call.1} parent=27 // pred_fallthru
          _
        %s172 = sand.u32 %s56, 1
        %s173 = scalar_lea.sflag [#allocation6], %s172
        %s174 = sand.u32 %s56, 1
        %s175 = smul.addr %s174, 16
        %s176 = scalar_lea.vmem [#allocation5], %s175
        // Predicated region
        $region33: #{tpu_custom_call.1} parent=27 // pred_check
          %p177 = pneg %p69
        $region34: #{tpu_custom_call.1} parent=27 // pred_check_branch
          %179 = sbr.rel (%p177) target = $region36
        $region35: #{tpu_custom_call.1} parent=27 // pred_region
          %180 = dma.done %s173, 256
        $region36: #{tpu_custom_call.1} parent=27 // pred_fallthru
          _
        %s181 = sand.u32 %s30, 1
        %s182 = scalar_lea.sflag [#allocation3], %s181
        %s183 = sand.u32 %s30, 1
        %s184 = smul.addr %s183, 16
        %s185 = scalar_lea.vmem [#allocation2], %s184
        %p186 = pneg %p43
        %p187 = pneg %p40
        %s188 = sand.u32 %s56, 1
        %s189 = scalar_lea.sflag [#allocation6], %s188
        %s190 = sand.u32 %s56, 1
        %s191 = smul.addr %s190, 16
        %s192 = scalar_lea.vmem [#allocation5], %s191
        %p193 = pneg %p69
        %p194 = pneg %p66
        %p195 = pneg %p95
        %p196 = pneg %p92
        %s197 = sand.u32 %s82, 1
        %s198 = scalar_lea.sflag [#allocation4], %s197
        %s199 = sand.u32 %s82, 1
        %s200 = smul.addr %s199, 8
        %s201 = scalar_lea.vmem [#allocation7], %s200
        %v202 = vld [vmem:[%s167] sm:$0xff]
        %s203 = scalar_lea.vmem %s167, 8 [#allocation2]
        %v204 = vld [vmem:[%s203] sm:$0xff]
        %v205 = vld [vmem:[%s176] sm:$0xff]
        %s206 = scalar_lea.vmem %s176, 8 [#allocation5]
        %v207 = vld [vmem:[%s206] sm:$0xff]
        %v208 = vlog2.pop %v205
        %v209 = vmul.f32 %v208, 0.6931472
        %v210 = vmul.f32 %v205, %v209
        %v211 = vmul.f32 %v205, %v207
        %v212 = vsub.f32 %v210, %v211
        %213 = vadd.xlane.f32.xlu0 %v212
        %v214 = vpop.xlane.xlu0 %213
        %v215 = vrot.slane %v214, 4
        %v216 = vadd.f32 %v214, %v215
        %v217 = vrot.slane %v216, 2
        %v218 = vadd.f32 %v216, %v217
        %v219 = vrot.slane %v218, 1
        %v220 = vadd.f32 %v218, %v219
        %s221 = vtos %v220
        %s222 = smul.f32 %s221, 0.125
        %s223 = sand.u32 2147483647, %s222
        %v224 = vsub.f32 %v202, %v204
        %v225 = vmul.f32 %v224, %v224
        %vm226 = vcmask 64512
        %v227 = vsel %vm226, %v225, 0.0
        %228 = vadd.xlane.f32.xlu0 %v227
        %v229 = vpop.xlane.xlu0 %228
        %v230 = vrot.slane %v229, 4
        %v231 = vadd.f32 %v229, %v230
        %v232 = vrot.slane %v231, 2
        %v233 = vadd.f32 %v231, %v232
        %v234 = vrot.slane %v233, 1
        %v235 = vadd.f32 %v233, %v234
        %s236 = vtos %v235
        %s237 = smul.f32 %s236, 0.015625
        %s238 = smul.f32 %s223, 2.0
        %s239 = sadd.f32 %s237, %s238
        %v240 = vlaneseq
        %v241 = vand.u32 %v240, 127
        %vm242 = vcmp.eq.s32.totalorder %v241, 0
        %vm243 = vcmp.eq.s32.totalorder %v241, 1
        %vm244 = vcmp.eq.s32.totalorder %v241, 2
        %v245 = vstv %s237
        %v246 = vsel %vm244, %v245, 0.0
        %v247 = vstv %s223
        %v248 = vsel %vm243, %v247, %v246
        %v249 = vstv %s239
        %v250 = vsel %vm242, %v249, %v248
        %251 = vst [vmem:[%s201] sm:$0xff] %v250
        %s252 = sand.u32 %s82, 1
        %s253 = scalar_lea.sflag [#allocation4], %s252
        %s254 = sand.u32 %s82, 1
        %s255 = smul.addr %s254, 8
        %s256 = scalar_lea.vmem [#allocation7], %s255
        // Predicated region
        $region37: #{tpu_custom_call.1} parent=27 // pred_check
          %p257 = pneg %p92
        $region38: #{tpu_custom_call.1} parent=27 // pred_check_branch
          %259 = sbr.rel (%p257) target = $region40
        $region39: #{tpu_custom_call.1} parent=27 // pred_region
          %s261 = ssub.s32 128, 128
          %262 = vsyncadd %s253, %s261
          %s263 = smul.addr %s22, 128
          %s264 = scalar_lea.hbm %s2, %s263
          %s266 = sshll.u32 %s256, 4
          %s267 = int_to_ptr.vmem [resolvable:$true] %s266
          %269 = dma.vmem_to_hbm [thread:$0]  %s267, 128, %s264, %s253
        $region40: #{tpu_custom_call.1} parent=27 // pred_fallthru
          _
      $region28: #{tpu_custom_call.1} parent=5 // pred_fallthru
        _
      %p270 = scmp.le.s32.totalorder 2, %s17
      // Predicated region
      $region41: #{tpu_custom_call.1} parent=5 // pred_check
        %p271 = pneg %p270
      $region42: #{tpu_custom_call.1} parent=5 // pred_check_branch
        %273 = sbr.rel (%p271) target = $region44
      $region43: #{tpu_custom_call.1} parent=5 // pred_region
        %s274 = ssub.s32 %s17, 2
        // Predicated region
        $region45: #{tpu_custom_call.1} parent=43 // pred_check
          %p275 = pneg %p98
        $region46: #{tpu_custom_call.1} parent=43 // pred_check_branch
          %277 = sbr.rel (%p275) target = $region48
        $region47: #{tpu_custom_call.1} parent=43 // pred_region
          %s278 = sand.u32 %s83, 1
          %s279 = scalar_lea.sflag [#allocation4], %s278
          %s280 = sand.u32 %s83, 1
          %s281 = smul.addr %s280, 8
          %s282 = scalar_lea.vmem [#allocation7], %s281
          %283 = dma.done %s279, 128
        $region48: #{tpu_custom_call.1} parent=43 // pred_fallthru
          _
      $region44: #{tpu_custom_call.1} parent=5 // pred_fallthru
        _
    $region6: #{tpu_custom_call.1} parent=1 // loop_footer
      %s21 = sadd.s32 1, %s17
    $region7: #{tpu_custom_call.1} parent=1 // loop_footer_branch
      %16 = sbr.rel target = $region3
    $region8: #{tpu_custom_call.1} parent=1 // loop_exit
      _
    %284 = vsyncpa [#allocation3], 1
    %s285 = scalar_lea.sflag [#allocation3], 1
    %286 = vsyncpa %s285, 1
    %287 = vsyncpa [#allocation6], 1
    %s288 = scalar_lea.sflag [#allocation6], 1
    %289 = vsyncpa %s288, 1
    %290 = vsyncpa [#allocation4], 1
    %s291 = scalar_lea.sflag [#allocation4], 1
    %292 = vsyncpa %s291, 1

</llo_original>
